<compile_context>
chip_gen: v7x
topology: tpu7x:2x2x1
jax: 0.10.0
libtpu: 0.0.40
codegen_flags: <defaults>
</compile_context>

<pallas_src>
import functools

import jax
import jax.numpy as jnp
import numpy as np
from jax import lax
from jax.experimental import pallas as pl
from jax.experimental.pallas import tpu as pltpu


def _conv_im2col_kernel(p_ref, w_ref, b_ref, o_ref):
    # p_ref: (B_blk, K, M)    patches, K = Cin*KH*KW = 27, M = OH*OW = 196 (lanes)
    # w_ref: (Cout, K)        flattened filter bank (64, 27)
    # b_ref: (Cout, 1)
    # o_ref: (B_blk, Cout, M)
    w = w_ref[...]
    b = b_ref[...]
    for i in range(p_ref.shape[0]):  # static, tiny (1 or N) -> unrolled
        acc = jnp.dot(w, p_ref[i], preferred_element_type=jnp.float32)  # (Cout, M)
        o_ref[i] = (acc + b).astype(o_ref.dtype)


def _spans_multiple_tensorcores() -> bool:
    """True when one Pallas program can use >1 TensorCore (megacore / v7x)."""
    try:
        kind = jax.devices()[0].device_kind.lower()
    except Exception:
        return False
    return any(tag in kind for tag in ("v4", "v5p", "v7", "7x"))


def conv2d_pallas(x_nchw, weight_oihw, bias, *, batch_parallel=None):
    """Conv2d(Cin, Cout, kernel_size=KHxKW), stride 1, no padding.

    x_nchw:      (N, Cin, H, W)      float32
    weight_oihw: (Cout, Cin, KH, KW) float32  (PyTorch layout)
    bias:        (Cout,)             float32
    returns:     (N, Cout, OH, OW)   float32
    """
    n, cin, h, w = x_nchw.shape
    cout, cin_w, kh, kw = weight_oihw.shape
    assert cin == cin_w
    oh, ow = h - kh + 1, w - kw + 1
    k = cin * kh * kw   # 27
    m = oh * ow         # 196

    # ---- im2col in plain JAX glue (stays NCHW; no layout transposes) ----
    # tap index t = i*KW + j (i outer, j inner) matches weight flattening below.
    patches = jnp.stack(
        [x_nchw[:, :, i:i + oh, j:j + ow] for i in range(kh) for j in range(kw)],
        axis=2)                                   # (N, Cin, KH*KW, OH, OW)
    patches = patches.reshape(n, k, m)            # contraction idx = c*KH*KW + i*KW + j
    w_mat = weight_oihw.reshape(cout, k)          # same flattening order
    b_col = bias.reshape(cout, 1)

    if batch_parallel is None:
        batch_parallel = _spans_multiple_tensorcores()
    bb = 1 if (batch_parallel and n > 1) else n   # images per grid step
    grid = (n // bb,)

    out = pl.pallas_call(
        _conv_im2col_kernel,
        out_shape=jax.ShapeDtypeStruct((n, cout, m), x_nchw.dtype),
        grid_spec=pltpu.PrefetchScalarGridSpec(
            num_scalar_prefetch=0,
            grid=grid,
            in_specs=[
                pl.BlockSpec((bb, k, m), lambda i: (i, 0, 0)),
                pl.BlockSpec((cout, k), lambda i: (0, 0)),
                pl.BlockSpec((cout, 1), lambda i: (0, 0)),
            ],
            out_specs=pl.BlockSpec((bb, cout, m), lambda i: (i, 0, 0)),
        ),
        compiler_params=pltpu.CompilerParams(
            dimension_semantics=("parallel",)),
        cost_estimate=pl.CostEstimate(
            flops=2 * n * cout * k * m + n * cout * m,
            transcendentals=0,
            bytes_accessed=4 * (n * k * m + cout * k + cout + n * cout * m)),
    )(patches, w_mat, b_col)

    # (N, Cout, OH*OW) -> (N, Cout, OH, OW): already NCHW, just reshape.
    return out.reshape(n, cout, oh, ow)


def tudui_forward(x_nchw, params):
    """Equivalent of Tudui.forward."""
    return conv2d_pallas(x_nchw, params["conv1_weight"], params["conv1_bias"])


def init_tudui_params(key):
    """Deterministic init matching nn.Conv2d(3, 64, 3) shapes (kaiming-uniform-ish)."""
    cout, cin, kh, kw = 64, 3, 3, 3
    k_w, k_b = jax.random.split(key)
    fan_in = cin * kh * kw
    bound = 1.0 / np.sqrt(fan_in)
    weight = jax.random.uniform(
        k_w, (cout, cin, kh, kw), jnp.float32, minval=-bound, maxval=bound)
    bias = jax.random.uniform(
        k_b, (cout,), jnp.float32, minval=-bound, maxval=bound)
    return {"conv1_weight": weight, "conv1_bias": bias}


if __name__ == "__main__":
    key = jax.random.PRNGKey(0)
    k_params, k_x = jax.random.split(key)

    params = init_tudui_params(k_params)
    # Small NCHW input consistent with Conv2d(3, 64, 3): batch=2, Cin=3, 16x16.
    x = jax.random.normal(k_x, (2, 3, 16, 16), jnp.float32)

    fwd = jax.jit(tudui_forward)
    out = fwd(x, params)
    out = jax.block_until_ready(out)

    # Cross-check against XLA's conv for correctness.
    ref = lax.conv_general_dilated(
        x, params["conv1_weight"],
        window_strides=(1, 1), padding="VALID",
        dimension_numbers=("NCHW", "OIHW", "NCHW"))
    ref = ref + params["conv1_bias"][None, :, None, None]
    assert out.shape == (2, 64, 14, 14), out.shape
    np.testing.assert_allclose(np.asarray(out), np.asarray(ref),
                               rtol=1e-4, atol=1e-4)

    print("KERNEL_OK")
</pallas_src>

<mosaic_0001>
module attributes {stable_mosaic.version = 11 : i64} {
  func.func @_conv_im2col_kernel(%arg0: i32, %arg1: memref<2x27x196xf32, #tpu.memory_space<vmem>>, %arg2: memref<64x27xf32, #tpu.memory_space<vmem>>, %arg3: memref<64x1xf32, #tpu.memory_space<vmem>>, %arg4: memref<2x64x196xf32, #tpu.memory_space<vmem>>) attributes {dimension_semantics = [#tpu.dimension_semantics<parallel>], iteration_bounds = array<i64: 1>, scalar_prefetch = 0 : i64, scratch_operands = 0 : i64, tpu.core_type = #tpu.core_type<tc>, window_params = [{transform_indices = @transform_0, window_bounds = array<i64: 2, 27, 196>}, {pipeline_mode = #tpu.pipeline_mode<synchronous>, transform_indices = @transform_1, window_bounds = array<i64: 64, 27>}, {pipeline_mode = #tpu.pipeline_mode<synchronous>, transform_indices = @transform_2, window_bounds = array<i64: 64, 1>}, {transform_indices = @transform_3, window_bounds = array<i64: 2, 64, 196>}]} {
    %c0 = arith.constant 0 : index
    %c0_0 = arith.constant 0 : index
    %0 = vector.load %arg2[%c0, %c0_0] : memref<64x27xf32, #tpu.memory_space<vmem>>, vector<64x27xf32>
    %c0_1 = arith.constant 0 : index
    %c0_2 = arith.constant 0 : index
    %1 = vector.load %arg3[%c0_1, %c0_2] : memref<64x1xf32, #tpu.memory_space<vmem>>, vector<64x1xf32>
    %c0_3 = arith.constant 0 : index
    %c0_4 = arith.constant 0 : index
    %c0_5 = arith.constant 0 : index
    %2 = vector.load %arg1[%c0_3, %c0_4, %c0_5] : memref<2x27x196xf32, #tpu.memory_space<vmem>>, vector<1x27x196xf32>
    %3 = vector.shape_cast %2 : vector<1x27x196xf32> to vector<27x196xf32>
    %cst = arith.constant dense<0.000000e+00> : vector<64x196xf32>
    %4 = tpu.matmul %0, %3, %cst {dimension_numbers = #tpu.dot_dimension_numbers<[1], [0], [0], [1], [0, 0, 1, 1], [], []>} : vector<64x27xf32>, vector<27x196xf32>, vector<64x196xf32> -> vector<64x196xf32>
    %5 = vector.broadcast %1 : vector<64x1xf32> to vector<64x196xf32>
    %6 = arith.addf %4, %5 : vector<64x196xf32>
    %c0_6 = arith.constant 0 : index
    %c0_7 = arith.constant 0 : index
    %c0_8 = arith.constant 0 : index
    %7 = vector.load %arg4[%c0_6, %c0_7, %c0_8] : memref<2x64x196xf32, #tpu.memory_space<vmem>>, vector<1x64x196xf32>
    %8 = vector.shape_cast %7 : vector<1x64x196xf32> to vector<64x196xf32>
    %9 = vector.shape_cast %6 : vector<64x196xf32> to vector<1x64x196xf32>
    tpu.vector_store %arg4[%c0_6, %c0_7, %c0_8], %9 {strides = array<i32>} : memref<2x64x196xf32, #tpu.memory_space<vmem>>, vector<1x64x196xf32>,
    %c1 = arith.constant 1 : index
    %c0_9 = arith.constant 0 : index
    %c0_10 = arith.constant 0 : index
    %10 = vector.load %arg1[%c1, %c0_9, %c0_10] : memref<2x27x196xf32, #tpu.memory_space<vmem>>, vector<1x27x196xf32>
    %11 = vector.shape_cast %10 : vector<1x27x196xf32> to vector<27x196xf32>
    %cst_11 = arith.constant dense<0.000000e+00> : vector<64x196xf32>
    %12 = tpu.matmul %0, %11, %cst_11 {dimension_numbers = #tpu.dot_dimension_numbers<[1], [0], [0], [1], [0, 0, 1, 1], [], []>} : vector<64x27xf32>, vector<27x196xf32>, vector<64x196xf32> -> vector<64x196xf32>
    %13 = vector.broadcast %1 : vector<64x1xf32> to vector<64x196xf32>
    %14 = arith.addf %12, %13 : vector<64x196xf32>
    %c1_12 = arith.constant 1 : index
    %c0_13 = arith.constant 0 : index
    %c0_14 = arith.constant 0 : index
    %15 = vector.load %arg4[%c1_12, %c0_13, %c0_14] : memref<2x64x196xf32, #tpu.memory_space<vmem>>, vector<1x64x196xf32>
    %16 = vector.shape_cast %15 : vector<1x64x196xf32> to vector<64x196xf32>
    %17 = vector.shape_cast %14 : vector<64x196xf32> to vector<1x64x196xf32>
    tpu.vector_store %arg4[%c1_12, %c0_13, %c0_14], %17 {strides = array<i32>} : memref<2x64x196xf32, #tpu.memory_space<vmem>>, vector<1x64x196xf32>,
    return
  }
  func.func @transform_0(%arg0: i32) -> (i32, i32, i32) {
    %c0_i32 = arith.constant 0 : i32
    %c0_i32_0 = arith.constant 0 : i32
    %c0_i32_1 = arith.constant 0 : i32
    return %arg0, %c0_i32, %c0_i32_0 : i32, i32, i32
  }
  func.func @transform_1(%arg0: i32) -> (i32, i32) {
    %c0_i32 = arith.constant 0 : i32
    %c0_i32_0 = arith.constant 0 : i32
    %c0_i32_1 = arith.constant 0 : i32
    return %c0_i32, %c0_i32_0 : i32, i32
  }
  func.func @transform_2(%arg0: i32) -> (i32, i32) {
    %c0_i32 = arith.constant 0 : i32
    %c0_i32_0 = arith.constant 0 : i32
    %c0_i32_1 = arith.constant 0 : i32
    return %c0_i32, %c0_i32_0 : i32, i32
  }
  func.func @transform_3(%arg0: i32) -> (i32, i32, i32) {
    %c0_i32 = arith.constant 0 : i32
    %c0_i32_0 = arith.constant 0 : i32
    %c0_i32_1 = arith.constant 0 : i32
    return %arg0, %c0_i32, %c0_i32_0 : i32, i32, i32
  }
}

</mosaic_0001>

<llo_original>
// kernel: tudui_forward.1
$region0: #{tudui_forward.1}
  #allocation0 [shape = 'u32[]', space=smem, size = 0x4, offset = 0x4, fixed_abs, tag = 'smem constant byte address 0x4 - core index']
  #allocation1 [shape = 'u32[144,128]{1,0:T(1,128)}', space=vmem, size = 0x12000, scoped, tag = 'internal scratch']
  %s0 = inlined_call_operand.vmem [shape: f32[2,27,196], index: 0, kind: input, shape index: {}]
  %s1 = inlined_call_operand.vmem [shape: f32[64,27], index: 1, kind: input, shape index: {}]
  %s2 = inlined_call_operand.vmem [shape: f32[64,1], index: 2, kind: input, shape index: {}]
  %s3 = inlined_call_operand.vmem [shape: f32[2,64,196], index: 3, kind: output, shape index: {}]
  %s4 = sld [smem:[#allocation0]]
  $region22: #{tudui_forward.1} parent=0
    _
  %s6 = ssub.s32 1, %s4
  %s7 = scalar_select 0, %s6, %s4
  // Predicated region
  $region2: #{tudui_forward.1} parent=0 // pred_check
    _
  $region3: #{tudui_forward.1} parent=0 // pred_check_branch
    %9 = sbr.rel (0) target = $region5
  $region4: #{tudui_forward.1} parent=0 // pred_region
    _
  $region5: #{tudui_forward.1} parent=0 // pred_fallthru
    _
  // Predicated region
  $region6: #{tudui_forward.1} parent=0 // pred_check
    _
  $region7: #{tudui_forward.1} parent=0 // pred_check_branch
    %11 = sbr.rel (0) target = $region9
  $region8: #{tudui_forward.1} parent=0 // pred_region
    _
  $region9: #{tudui_forward.1} parent=0 // pred_fallthru
    _
  // Predicated region
  $region10: #{tudui_forward.1} parent=0 // pred_check
    _
  $region11: #{tudui_forward.1} parent=0 // pred_check_branch
    %13 = sbr.rel (0) target = $region13
  $region12: #{tudui_forward.1} parent=0 // pred_region
    _
  $region13: #{tudui_forward.1} parent=0 // pred_fallthru
    _
  %v14 = vld [vmem:[%s1] sm:$0xff]
  %v15 = vld [vmem:[%s1 + $0x8] sm:$0xff]
  %v16 = vld [vmem:[%s1 + $0x10] sm:$0xff]
  %v17 = vld [vmem:[%s1 + $0x18] sm:$0xff]
  %v18 = vld [vmem:[%s1 + $0x20] sm:$0xff]
  %v19 = vld [vmem:[%s1 + $0x28] sm:$0xff]
  %v20 = vld [vmem:[%s1 + $0x30] sm:$0xff]
  %v21 = vld [vmem:[%s1 + $0x38] sm:$0xff]
  %v22 = vld [vmem:[%s2] sm:$0xff]
  %v23 = vld [vmem:[%s2 + $0x8] sm:$0xff]
  %v24 = vld [vmem:[%s2 + $0x10] sm:$0xff]
  %v25 = vld [vmem:[%s2 + $0x18] sm:$0xff]
  %v26 = vld [vmem:[%s2 + $0x20] sm:$0xff]
  %v27 = vld [vmem:[%s2 + $0x28] sm:$0xff]
  %v28 = vld [vmem:[%s2 + $0x30] sm:$0xff]
  %v29 = vld [vmem:[%s2 + $0x38] sm:$0xff]
  %v30 = vld [vmem:[%s0] sm:$0xff]
  %v31 = vld [vmem:[%s0 + $0x8] sm:$0xff]
  %v32 = vld [vmem:[%s0 + $0x10] sm:$0xff]
  %v33 = vld [vmem:[%s0 + $0x18] sm:$0xff]
  %v34 = vld [vmem:[%s0 + $0x20] sm:$0xff]
  %v35 = vld [vmem:[%s0 + $0x28] sm:$0xff]
  %v36 = vld [vmem:[%s0 + $0x30] sm:$0x7]
  %v37 = vld [vmem:[%s0 + $0x38] sm:$0x7]
  %39 = vset.pattern.permute.xlu0 0
  %40 = vperm.xlu0 %39, %v22
  %v41 = vpop.permute.xlu0 %40
  %44 = vset.pattern.permute.xlu0 0
  %45 = vperm.xlu0 %44, %v23
  %v46 = vpop.permute.xlu0 %45
  %49 = vset.pattern.permute.xlu0 0
  %50 = vperm.xlu0 %49, %v24
  %v51 = vpop.permute.xlu0 %50
  %54 = vset.pattern.permute.xlu0 0
  %55 = vperm.xlu0 %54, %v25
  %v56 = vpop.permute.xlu0 %55
  %59 = vset.pattern.permute.xlu0 0
  %60 = vperm.xlu0 %59, %v26
  %v61 = vpop.permute.xlu0 %60
  %64 = vset.pattern.permute.xlu0 0
  %65 = vperm.xlu0 %64, %v27
  %v66 = vpop.permute.xlu0 %65
  %69 = vset.pattern.permute.xlu0 0
  %70 = vperm.xlu0 %69, %v28
  %v71 = vpop.permute.xlu0 %70
  %74 = vset.pattern.permute.xlu0 0
  %75 = vperm.xlu0 %74, %v29
  %v76 = vpop.permute.xlu0 %75
  %vm78 = vcmask 220160
  %v80 = vsel %vm78, %v14, 0
  %v83 = vsel %vm78, %v15, 0
  %v86 = vsel %vm78, %v16, 0
  %v89 = vsel %vm78, %v17, 0
  %v92 = vsel %vm78, %v18, 0
  %v95 = vsel %vm78, %v19, 0
  %v98 = vsel %vm78, %v20, 0
  %v101 = vsel %vm78, %v21, 0
  %vm103 = vcmask 1042432
  %v105 = vsel %vm103, %v36, 0
  %v108 = vsel %vm103, %v37, 0
  %110 = vmatprep.subr.mxu0 %v31
  %111 = vmatpush1.msra.mxu0 %v30
  %112 = vmatprep.subr.mxu0 %v33
  %113 = vmatpush1.msra.mxu0 %v32
  %114 = vmatprep.subr.mxu0 %v35
  %115 = vmatpush1.msra.mxu0 %v34
  %116 = vmatprep.subr.mxu0 %v108
  %117 = vmatpush1.msra.mxu0 %v105
  %118 = vmatprep.subr.mxu0 0.0
  %119 = vmatpush1.msra.mxu0 0.0
  %120 = vmatprep.subr.mxu0 0.0
  %121 = vmatpush1.msra.mxu0 0.0
  %122 = vmatprep.subr.mxu0 0.0
  %123 = vmatpush1.msra.mxu0 0.0
  %124 = vmatprep.subr.mxu0 0.0
  %125 = vmatpush1.msra.mxu0 0.0
  %126 = vmatprep.subr.mxu0 0.0
  %127 = vmatpush1.msra.mxu0 0.0
  %128 = vmatprep.subr.mxu0 0.0
  %129 = vmatpush1.msra.mxu0 0.0
  %130 = vmatprep.subr.mxu0 0.0
  %131 = vmatpush1.msra.mxu0 0.0
  %132 = vmatprep.subr.mxu0 0.0
  %133 = vmatpush1.msra.mxu0 0.0
  %134 = vmatprep.subr.mxu0 0.0
  %135 = vmatpush1.msra.mxu0 0.0
  %136 = vmatprep.subr.mxu0 0.0
  %137 = vmatpush1.msra.mxu0 0.0
  %138 = vmatprep.subr.mxu0 0.0
  %139 = vmatpush1.msra.mxu0 0.0
  %140 = vmatprep.subr.mxu0 0.0
  %141 = vmatpush1.msra.mxu0 0.0
  %142 = vmatprep.subr.mxu0 0.0
  %143 = vmatpush1.msra.mxu0 0.0
  %144 = vmatprep.subr.mxu0 0.0
  %145 = vmatpush1.msra.mxu0 0.0
  %146 = vmatprep.subr.mxu0 0.0
  %147 = vmatpush1.msra.mxu0 0.0
  %148 = vmatprep.subr.mxu0 0.0
  %149 = vmatpush1.msra.mxu0 0.0
  %150 = vmatprep.subr.mxu0 0.0
  %151 = vmatpush1.msra.mxu0 0.0
  %152 = vmatprep.subr.mxu0 0.0
  %153 = vmatpush1.msra.mxu0 0.0
  %154 = vmatprep.subr.mxu0 0.0
  %155 = vmatpush1.msra.mxu0 0.0
  %156 = vmatprep.subr.mxu0 0.0
  %157 = vmatpush1.msra.mxu0 0.0
  %158 = vmatprep.subr.mxu0 0.0
  %159 = vmatpush1.msra.mxu0 0.0
  %160 = vmatprep.subr.mxu0 0.0
  %161 = vmatpush1.msra.mxu0 0.0
  %162 = vmatprep.subr.mxu0 0.0
  %163 = vmatpush1.msra.mxu0 0.0
  %164 = vmatprep.subr.mxu0 0.0
  %165 = vmatpush1.msra.mxu0 0.0
  %166 = vmatprep.subr.mxu0 0.0
  %167 = vmatpush1.msra.mxu0 0.0
  %168 = vmatprep.subr.mxu0 0.0
  %169 = vmatpush1.msra.mxu0 0.0
  %170 = vmatprep.subr.mxu0 0.0
  %171 = vmatpush1.msra.mxu0 0.0
  %172 = vmatprep.subr.mxu0 0.0
  %173 = vmatpush1.msra.mxu0 0.0
  %174 = vmatprep.mubr.f32.mxu0 0.0
  %175 = vmatmul.mubr.f32.gmra.mrb[0].mxu0 %v80
  %v176 = vpop.f32.mrb[0].mxu0
  %v177 = vadd.f32 %v41, %v176
  %v178 = vpop.f32.mrb[0].mxu0
  %v179 = vadd.f32 %v41, %v178
  %180 = vmatprep.mubr.f32.mxu0 0.0
  %181 = vmatmul.mubr.f32.gmra.mrb[0].mxu0 %v83
  %v182 = vpop.f32.mrb[0].mxu0
  %v183 = vadd.f32 %v46, %v182
  %v184 = vpop.f32.mrb[0].mxu0
  %v185 = vadd.f32 %v46, %v184
  %186 = vmatprep.mubr.f32.mxu0 0.0
  %187 = vmatmul.mubr.f32.gmra.mrb[0].mxu0 %v86
  %v188 = vpop.f32.mrb[0].mxu0
  %v189 = vadd.f32 %v51, %v188
  %v190 = vpop.f32.mrb[0].mxu0
  %v191 = vadd.f32 %v51, %v190
  %192 = vmatprep.mubr.f32.mxu0 0.0
  %193 = vmatmul.mubr.f32.gmra.mrb[0].mxu0 %v89
  %v194 = vpop.f32.mrb[0].mxu0
  %v195 = vadd.f32 %v56, %v194
  %v196 = vpop.f32.mrb[0].mxu0
  %v197 = vadd.f32 %v56, %v196
  %198 = vmatprep.mubr.f32.mxu0 0.0
  %199 = vmatmul.mubr.f32.gmra.mrb[0].mxu0 %v92
  %v200 = vpop.f32.mrb[0].mxu0
  %v201 = vadd.f32 %v61, %v200
  %v202 = vpop.f32.mrb[0].mxu0
  %v203 = vadd.f32 %v61, %v202
  %204 = vmatprep.mubr.f32.mxu0 0.0
  %205 = vmatmul.mubr.f32.gmra.mrb[0].mxu0 %v95
  %v206 = vpop.f32.mrb[0].mxu0
  %v207 = vadd.f32 %v66, %v206
  %v208 = vpop.f32.mrb[0].mxu0
  %v209 = vadd.f32 %v66, %v208
  %210 = vmatprep.mubr.f32.mxu0 0.0
  %211 = vmatmul.mubr.f32.gmra.mrb[0].mxu0 %v98
  %v212 = vpop.f32.mrb[0].mxu0
  %v213 = vadd.f32 %v71, %v212
  %v214 = vpop.f32.mrb[0].mxu0
  %v215 = vadd.f32 %v71, %v214
  %216 = vmatprep.mubr.f32.mxu0 0.0
  %217 = vmatmul.mubr.f32.gmra.mrb[0].mxu0 %v101
  %v218 = vpop.f32.mrb[0].mxu0
  %v219 = vadd.f32 %v76, %v218
  %v220 = vpop.f32.mrb[0].mxu0
  %v221 = vadd.f32 %v76, %v220
  %222 = vdwg.mxu0
  %223 = vst [vmem:[%s3] sm:$0xff] %v177
  %vm224 = vcmask 556032
  %225 = vst.msk [vmem:[%s3 + $0x8] sm:$0xff] %vm224, %v179
  %226 = vst [vmem:[%s3 + $0x10] sm:$0xff] %v183
  %227 = vst.msk [vmem:[%s3 + $0x18] sm:$0xff] %vm224, %v185
  %228 = vst [vmem:[%s3 + $0x20] sm:$0xff] %v189
  %229 = vst.msk [vmem:[%s3 + $0x28] sm:$0xff] %vm224, %v191
  %230 = vst [vmem:[%s3 + $0x30] sm:$0xff] %v195
  %231 = vst.msk [vmem:[%s3 + $0x38] sm:$0xff] %vm224, %v197
  %232 = vst [vmem:[%s3 + $0x40] sm:$0xff] %v201
  %233 = vst.msk [vmem:[%s3 + $0x48] sm:$0xff] %vm224, %v203
  %234 = vst [vmem:[%s3 + $0x50] sm:$0xff] %v207
  %235 = vst.msk [vmem:[%s3 + $0x58] sm:$0xff] %vm224, %v209
  %236 = vst [vmem:[%s3 + $0x60] sm:$0xff] %v213
  %237 = vst.msk [vmem:[%s3 + $0x68] sm:$0xff] %vm224, %v215
  %238 = vst [vmem:[%s3 + $0x70] sm:$0xff] %v219
  %239 = vst.msk [vmem:[%s3 + $0x78] sm:$0xff] %vm224, %v221
  %s240 = scalar_lea.vmem %s0, 64
  %v241 = vld [vmem:[%s240] sm:$0xff]
  %v242 = vld [vmem:[%s240 + $0x8] sm:$0xff]
  %v243 = vld [vmem:[%s240 + $0x10] sm:$0xff]
  %v244 = vld [vmem:[%s240 + $0x18] sm:$0xff]
  %v245 = vld [vmem:[%s240 + $0x20] sm:$0xff]
  %v246 = vld [vmem:[%s240 + $0x28] sm:$0xff]
  %v247 = vld [vmem:[%s240 + $0x30] sm:$0x7]
  %v248 = vld [vmem:[%s240 + $0x38] sm:$0x7]
  %v250 = vsel %vm103, %v247, 0
  %v253 = vsel %vm103, %v248, 0
  %255 = vmatprep.subr.mxu0 %v242
  %256 = vmatpush1.msra.mxu0 %v241
  %257 = vmatprep.subr.mxu0 %v244
  %258 = vmatpush1.msra.mxu0 %v243
  %259 = vmatprep.subr.mxu0 %v246
  %260 = vmatpush1.msra.mxu0 %v245
  %261 = vmatprep.subr.mxu0 %v253
  %262 = vmatpush1.msra.mxu0 %v250
  %263 = vmatprep.subr.mxu0 0.0
  %264 = vmatpush1.msra.mxu0 0.0
  %265 = vmatprep.subr.mxu0 0.0
  %266 = vmatpush1.msra.mxu0 0.0
  %267 = vmatprep.subr.mxu0 0.0
  %268 = vmatpush1.msra.mxu0 0.0
  %269 = vmatprep.subr.mxu0 0.0
  %270 = vmatpush1.msra.mxu0 0.0
  %271 = vmatprep.subr.mxu0 0.0
  %272 = vmatpush1.msra.mxu0 0.0
  %273 = vmatprep.subr.mxu0 0.0
  %274 = vmatpush1.msra.mxu0 0.0
  %275 = vmatprep.subr.mxu0 0.0
  %276 = vmatpush1.msra.mxu0 0.0
  %277 = vmatprep.subr.mxu0 0.0
  %278 = vmatpush1.msra.mxu0 0.0
  %279 = vmatprep.subr.mxu0 0.0
  %280 = vmatpush1.msra.mxu0 0.0
  %281 = vmatprep.subr.mxu0 0.0
  %282 = vmatpush1.msra.mxu0 0.0
  %283 = vmatprep.subr.mxu0 0.0
  %284 = vmatpush1.msra.mxu0 0.0
  %285 = vmatprep.subr.mxu0 0.0
  %286 = vmatpush1.msra.mxu0 0.0
  %287 = vmatprep.subr.mxu0 0.0
  %288 = vmatpush1.msra.mxu0 0.0
  %289 = vmatprep.subr.mxu0 0.0
  %290 = vmatpush1.msra.mxu0 0.0
  %291 = vmatprep.subr.mxu0 0.0
  %292 = vmatpush1.msra.mxu0 0.0
  %293 = vmatprep.subr.mxu0 0.0
  %294 = vmatpush1.msra.mxu0 0.0
  %295 = vmatprep.subr.mxu0 0.0
  %296 = vmatpush1.msra.mxu0 0.0
  %297 = vmatprep.subr.mxu0 0.0
  %298 = vmatpush1.msra.mxu0 0.0
  %299 = vmatprep.subr.mxu0 0.0
  %300 = vmatpush1.msra.mxu0 0.0
  %301 = vmatprep.subr.mxu0 0.0
  %302 = vmatpush1.msra.mxu0 0.0
  %303 = vmatprep.subr.mxu0 0.0
  %304 = vmatpush1.msra.mxu0 0.0
  %305 = vmatprep.subr.mxu0 0.0
  %306 = vmatpush1.msra.mxu0 0.0
  %307 = vmatprep.subr.mxu0 0.0
  %308 = vmatpush1.msra.mxu0 0.0
  %309 = vmatprep.subr.mxu0 0.0
  %310 = vmatpush1.msra.mxu0 0.0
  %311 = vmatprep.subr.mxu0 0.0
  %312 = vmatpush1.msra.mxu0 0.0
  %313 = vmatprep.subr.mxu0 0.0
  %314 = vmatpush1.msra.mxu0 0.0
  %315 = vmatprep.subr.mxu0 0.0
  %316 = vmatpush1.msra.mxu0 0.0
  %317 = vmatprep.subr.mxu0 0.0
  %318 = vmatpush1.msra.mxu0 0.0
  %319 = vmatprep.mubr.f32.mxu0 0.0
  %320 = vmatmul.mubr.f32.gmra.mrb[0].mxu0 %v80
  %v321 = vpop.f32.mrb[0].mxu0
  %v322 = vadd.f32 %v41, %v321
  %v323 = vpop.f32.mrb[0].mxu0
  %v324 = vadd.f32 %v41, %v323
  %325 = vmatprep.mubr.f32.mxu0 0.0
  %326 = vmatmul.mubr.f32.gmra.mrb[0].mxu0 %v83
  %v327 = vpop.f32.mrb[0].mxu0
  %v328 = vadd.f32 %v46, %v327
  %v329 = vpop.f32.mrb[0].mxu0
  %v330 = vadd.f32 %v46, %v329
  %331 = vmatprep.mubr.f32.mxu0 0.0
  %332 = vmatmul.mubr.f32.gmra.mrb[0].mxu0 %v86
  %v333 = vpop.f32.mrb[0].mxu0
  %v334 = vadd.f32 %v51, %v333
  %v335 = vpop.f32.mrb[0].mxu0
  %v336 = vadd.f32 %v51, %v335
  %337 = vmatprep.mubr.f32.mxu0 0.0
  %338 = vmatmul.mubr.f32.gmra.mrb[0].mxu0 %v89
  %v339 = vpop.f32.mrb[0].mxu0
  %v340 = vadd.f32 %v56, %v339
  %v341 = vpop.f32.mrb[0].mxu0
  %v342 = vadd.f32 %v56, %v341
  %343 = vmatprep.mubr.f32.mxu0 0.0
  %344 = vmatmul.mubr.f32.gmra.mrb[0].mxu0 %v92
  %v345 = vpop.f32.mrb[0].mxu0
  %v346 = vadd.f32 %v61, %v345
  %v347 = vpop.f32.mrb[0].mxu0
  %v348 = vadd.f32 %v61, %v347
  %349 = vmatprep.mubr.f32.mxu0 0.0
  %350 = vmatmul.mubr.f32.gmra.mrb[0].mxu0 %v95
  %v351 = vpop.f32.mrb[0].mxu0
  %v352 = vadd.f32 %v66, %v351
  %v353 = vpop.f32.mrb[0].mxu0
  %v354 = vadd.f32 %v66, %v353
  %355 = vmatprep.mubr.f32.mxu0 0.0
  %356 = vmatmul.mubr.f32.gmra.mrb[0].mxu0 %v98
  %v357 = vpop.f32.mrb[0].mxu0
  %v358 = vadd.f32 %v71, %v357
  %v359 = vpop.f32.mrb[0].mxu0
  %v360 = vadd.f32 %v71, %v359
  %361 = vmatprep.mubr.f32.mxu0 0.0
  %362 = vmatmul.mubr.f32.gmra.mrb[0].mxu0 %v101
  %v363 = vpop.f32.mrb[0].mxu0
  %v364 = vadd.f32 %v76, %v363
  %v365 = vpop.f32.mrb[0].mxu0
  %v366 = vadd.f32 %v76, %v365
  %367 = vdwg.mxu0
  %s368 = scalar_lea.vmem %s3, 128
  %369 = vst [vmem:[%s368] sm:$0xff] %v322
  %370 = vst.msk [vmem:[%s368 + $0x8] sm:$0xff] %vm224, %v324
  %371 = vst [vmem:[%s368 + $0x10] sm:$0xff] %v328
  %372 = vst.msk [vmem:[%s368 + $0x18] sm:$0xff] %vm224, %v330
  %373 = vst [vmem:[%s368 + $0x20] sm:$0xff] %v334
  %374 = vst.msk [vmem:[%s368 + $0x28] sm:$0xff] %vm224, %v336
  %375 = vst [vmem:[%s368 + $0x30] sm:$0xff] %v340
  %376 = vst.msk [vmem:[%s368 + $0x38] sm:$0xff] %vm224, %v342
  %377 = vst [vmem:[%s368 + $0x40] sm:$0xff] %v346
  %378 = vst.msk [vmem:[%s368 + $0x48] sm:$0xff] %vm224, %v348
  %379 = vst [vmem:[%s368 + $0x50] sm:$0xff] %v352
  %380 = vst.msk [vmem:[%s368 + $0x58] sm:$0xff] %vm224, %v354
  %381 = vst [vmem:[%s368 + $0x60] sm:$0xff] %v358
  %382 = vst.msk [vmem:[%s368 + $0x68] sm:$0xff] %vm224, %v360
  %383 = vst [vmem:[%s368 + $0x70] sm:$0xff] %v364
  %384 = vst.msk [vmem:[%s368 + $0x78] sm:$0xff] %vm224, %v366
  // Predicated region
  $region14: #{tudui_forward.1} parent=0 // pred_check
    _
  $region15: #{tudui_forward.1} parent=0 // pred_check_branch
    %386 = sbr.rel (0) target = $region17
  $region16: #{tudui_forward.1} parent=0 // pred_region
    _
  $region17: #{tudui_forward.1} parent=0 // pred_fallthru
    _
  // Predicated region
  $region18: #{tudui_forward.1} parent=0 // pred_check
    _
  $region19: #{tudui_forward.1} parent=0 // pred_check_branch
    %388 = sbr.rel (0) target = $region21
  $region20: #{tudui_forward.1} parent=0 // pred_region
    _
  $region21: #{tudui_forward.1} parent=0 // pred_fallthru
    _

</llo_original>
